<compile_context>
chip_gen: v7x
topology: tpu7x:2x2x1
jax: 0.10.0
libtpu: 0.0.40
codegen_flags: <defaults>
</compile_context>

<pallas_src>
import functools

import jax
import jax.numpy as jnp
from jax.experimental import pallas as pl
from jax.experimental.pallas import tpu as pltpu

LN_EPS = 1e-5  # PyTorch nn.LayerNorm default


def _round_up(n, m):
    return ((n + m - 1) // m) * m


def _layernorm_f32(xf, gamma, beta, d_real, d_pad):
    """PyTorch-style (biased variance) LayerNorm on an f32 tile, two-pass."""
    inv_d = 1.0 / d_real
    mean = jnp.sum(xf, axis=-1, keepdims=True) * inv_d   # zero-padded lanes add 0
    centered = xf - mean
    if d_pad != d_real:
        # Padded feature lanes hold x == 0, so (0 - mean) would pollute the
        # variance; mask them back to zero (only emitted when padding exists).
        lane = jax.lax.broadcasted_iota(jnp.int32, (1, d_pad), 1)
        centered = jnp.where(lane < d_real, centered, 0.0)
    var = jnp.sum(centered * centered, axis=-1, keepdims=True) * inv_d
    inv_std = jax.lax.rsqrt(var + LN_EPS)
    # gamma/beta are f32 and zero-padded -> padded lanes of `normed` end up 0.
    return centered * inv_std * gamma + beta


def _prenorm_resident_kernel(x_ref, gamma_ref, beta_ref, w_ref, b_ref, o_ref,
                             *, d_real, d_pad):
    # Path A: W (D_pad, DO_pad) is resident; one LN + one matmul per row tile.
    xf = x_ref[...].astype(jnp.float32)
    normed = _layernorm_f32(xf, gamma_ref[...], beta_ref[...], d_real, d_pad)
    y = jnp.dot(normed.astype(w_ref.dtype), w_ref[...],
                preferred_element_type=jnp.float32)
    o_ref[...] = (y + b_ref[...]).astype(o_ref.dtype)


def _prenorm_tiled_kernel(x_ref, gamma_ref, beta_ref, w_ref, b_ref, o_ref,
                          normed_ref, *, d_real, d_pad):
    # Path B: LN only on the first output-column tile; cached (in w dtype) and
    # reused for every subsequent j -> steady state is pure MXU + bias add.
    @pl.when(pl.program_id(1) == 0)
    def _():
        xf = x_ref[...].astype(jnp.float32)
        normed = _layernorm_f32(xf, gamma_ref[...], beta_ref[...], d_real, d_pad)
        normed_ref[...] = normed.astype(normed_ref.dtype)

    y = jnp.dot(normed_ref[...], w_ref[...], preferred_element_type=jnp.float32)
    o_ref[...] = (y + b_ref[...]).astype(o_ref.dtype)


@jax.jit
def prenorm_fn(x, gamma, beta, w, b):
    """PreNorm forward: fn(LayerNorm(x)), fn = Linear.

    x:     (B, N, D)
    gamma: (D,)   beta: (D,)
    w:     (D, DO)  b: (DO,)
    returns (B, N, DO)
    """
    B, N, D = x.shape
    DO = w.shape[1]
    rows = B * N

    x_bytes = jnp.dtype(x.dtype).itemsize
    w_bytes = jnp.dtype(w.dtype).itemsize

    # Row-tile: 128 rows is enough M amortization on all chips (v5e MXU is
    # 128-wide) and keeps f32 LN temporaries small; tiny inputs use one tile.
    pack = {4: 8, 2: 16, 1: 32}.get(x_bytes, 8)
    TM = 128 if rows >= 128 else _round_up(rows, pack)
    rows_pad = _round_up(rows, TM)

    # Lane-dense feature dims.
    D_pad = _round_up(D, 128)
    DO_pad = _round_up(DO, 128)

    # --- conditional padding (skipped entirely for the aligned ViT case) ---
    x2 = x.reshape(rows, D)
    if rows_pad != rows or D_pad != D:
        # Padded rows are all-zero -> they produce beta @ W + b, sliced off below.
        x2 = jnp.pad(x2, ((0, rows_pad - rows), (0, D_pad - D)))
    gamma2 = gamma.astype(jnp.float32)
    beta2 = beta.astype(jnp.float32)
    if D_pad != D:
        gamma2 = jnp.pad(gamma2, (0, D_pad - D))
        beta2 = jnp.pad(beta2, (0, D_pad - D))
    gamma2 = gamma2.reshape(1, D_pad)
    beta2 = beta2.reshape(1, D_pad)
    w2 = w
    if D_pad != D or DO_pad != DO:
        w2 = jnp.pad(w, ((0, D_pad - D), (0, DO_pad - DO)))
    b2 = b.astype(jnp.float32)
    if DO_pad != DO:
        b2 = jnp.pad(b2, (0, DO_pad - DO))
    b2 = b2.reshape(1, DO_pad)

    ln_tmp = 4 * TM * D_pad * 4             # in-kernel f32 LN temporaries
    params = 2 * (2 * D_pad + DO_pad) * 4   # gamma/beta/bias buffers
    VMEM_CAP = 48 * 1024 * 1024             # headroom vs v7x's 64 MiB physical VMEM

    kern_static = dict(d_real=D, d_pad=D_pad)

    est_resident = (2 * TM * D_pad * x_bytes        # x tiles (double-buffered)
                    + 2 * D_pad * DO_pad * w_bytes  # resident W (buffer allowance)
                    + 2 * TM * DO_pad * x_bytes     # out tiles
                    + ln_tmp + params)

    if est_resident <= 44 * 1024 * 1024:
        # ----- Path A: resident W, 1-D grid, LN once per row tile -----
        vmem_limit = int(min(VMEM_CAP,
                             max(est_resident + (4 << 20), (est_resident * 3) // 2)))
        out = pl.pallas_call(
            functools.partial(_prenorm_resident_kernel, **kern_static),
            out_shape=jax.ShapeDtypeStruct((rows_pad, DO_pad), x.dtype),
            grid_spec=pltpu.PrefetchScalarGridSpec(
                num_scalar_prefetch=0,
                grid=(rows_pad // TM,),
                in_specs=[
                    pl.BlockSpec((TM, D_pad), lambda i: (i, 0)),     # x tile
                    pl.BlockSpec((1, D_pad), lambda i: (0, 0)),      # gamma (invariant)
                    pl.BlockSpec((1, D_pad), lambda i: (0, 0)),      # beta  (invariant)
                    pl.BlockSpec((D_pad, DO_pad), lambda i: (0, 0)), # W resident
                    pl.BlockSpec((1, DO_pad), lambda i: (0, 0)),     # bias  (invariant)
                ],
                out_specs=pl.BlockSpec((TM, DO_pad), lambda i: (i, 0)),
            ),
            compiler_params=pltpu.CompilerParams(
                dimension_semantics=("parallel",),
                vmem_limit_bytes=vmem_limit,
            ),
        )(x2, gamma2, beta2, w2, b2)
    else:
        # ----- Path B: streamed W, cached normed scratch, sequential j axis -----
        TN = 512 if DO_pad % 512 == 0 else (256 if DO_pad % 256 == 0 else 128)
        TN = min(TN, DO_pad)
        est = (2 * TM * D_pad * x_bytes
               + 3 * D_pad * TN * w_bytes     # Buffered(3) W tiles
               + 2 * TM * TN * x_bytes        # out tiles
               + TM * D_pad * w_bytes         # normed scratch (w dtype)
               + ln_tmp + params)
        vmem_limit = int(min(VMEM_CAP, max(est + (4 << 20), (est * 3) // 2)))
        out = pl.pallas_call(
            functools.partial(_prenorm_tiled_kernel, **kern_static),
            out_shape=jax.ShapeDtypeStruct((rows_pad, DO_pad), x.dtype),
            grid_spec=pltpu.PrefetchScalarGridSpec(
                num_scalar_prefetch=0,
                grid=(rows_pad // TM, DO_pad // TN),
                in_specs=[
                    pl.BlockSpec((TM, D_pad), lambda i, j: (i, 0)),  # x (const over j)
                    pl.BlockSpec((1, D_pad), lambda i, j: (0, 0)),   # gamma
                    pl.BlockSpec((1, D_pad), lambda i, j: (0, 0)),   # beta
                    pl.BlockSpec((D_pad, TN), lambda i, j: (0, j),   # W column tile
                                 pipeline_mode=pl.Buffered(3)),
                    pl.BlockSpec((1, TN), lambda i, j: (0, j)),      # bias column tile
                ],
                out_specs=pl.BlockSpec((TM, TN), lambda i, j: (i, j)),
                scratch_shapes=[pltpu.VMEM((TM, D_pad), w.dtype)],   # cached normed x
            ),
            compiler_params=pltpu.CompilerParams(
                dimension_semantics=("parallel", "arbitrary"),
                vmem_limit_bytes=vmem_limit,
            ),
        )(x2, gamma2, beta2, w2, b2)

    if rows_pad != rows or DO_pad != DO:
        out = out[:rows, :DO]
    return out.reshape(B, N, DO)


def _reference(x, gamma, beta, w, b):
    xf = x.astype(jnp.float32)
    mean = jnp.mean(xf, axis=-1, keepdims=True)
    var = jnp.mean((xf - mean) ** 2, axis=-1, keepdims=True)
    normed = (xf - mean) * jax.lax.rsqrt(var + LN_EPS)
    normed = normed * gamma.astype(jnp.float32) + beta.astype(jnp.float32)
    return jnp.dot(normed, w.astype(jnp.float32)) + b.astype(jnp.float32)


if __name__ == "__main__":
    # TODO(synk): the spec's `fn` is an arbitrary submodule; only the Linear
    # case is fused here (the usual fn inside a ViT block).
    key = jax.random.PRNGKey(0)
    B, N, D = 2, 8, 32   # batch=2, seq=8, hidden dim=32
    DO = 32

    kx, kw = jax.random.split(key)
    x = jax.random.normal(kx, (B, N, D), dtype=jnp.float32)

    # LayerNorm params: PyTorch defaults (weight=1, bias=0)
    gamma = jnp.ones((D,), dtype=jnp.float32)
    beta = jnp.zeros((D,), dtype=jnp.float32)

    # fn = Linear(D, DO): deterministic xavier-normal-like init + zero bias
    std = (2.0 / (D + DO)) ** 0.5
    w = std * jax.random.normal(kw, (D, DO), dtype=jnp.float32)
    b = jnp.zeros((DO,), dtype=jnp.float32)

    out = prenorm_fn(x, gamma, beta, w, b)
    out = jax.block_until_ready(out)

    ref = _reference(x, gamma, beta, w, b)
    assert out.shape == (B, N, DO)
    assert jnp.allclose(out, ref.astype(out.dtype), atol=1e-4, rtol=1e-4), \
        "mismatch vs reference"

    print("KERNEL_OK")
</pallas_src>

<mosaic_0001>
module attributes {stable_mosaic.version = 11 : i64} {
  func.func @_prenorm_resident_kernel(%arg0: i32, %arg1: memref<16x128xf32, #tpu.memory_space<vmem>>, %arg2: memref<1x128xf32, #tpu.memory_space<vmem>>, %arg3: memref<1x128xf32, #tpu.memory_space<vmem>>, %arg4: memref<128x128xf32, #tpu.memory_space<vmem>>, %arg5: memref<1x128xf32, #tpu.memory_space<vmem>>, %arg6: memref<16x128xf32, #tpu.memory_space<vmem>>) attributes {dimension_semantics = [#tpu.dimension_semantics<parallel>], iteration_bounds = array<i64: 1>, scalar_prefetch = 0 : i64, scratch_operands = 0 : i64, tpu.core_type = #tpu.core_type<tc>, window_params = [{transform_indices = @transform_0, window_bounds = array<i64: 16, 128>}, {pipeline_mode = #tpu.pipeline_mode<synchronous>, transform_indices = @transform_1, window_bounds = array<i64: 1, 128>}, {pipeline_mode = #tpu.pipeline_mode<synchronous>, transform_indices = @transform_2, window_bounds = array<i64: 1, 128>}, {pipeline_mode = #tpu.pipeline_mode<synchronous>, transform_indices = @transform_3, window_bounds = array<i64: 128, 128>}, {pipeline_mode = #tpu.pipeline_mode<synchronous>, transform_indices = @transform_4, window_bounds = array<i64: 1, 128>}, {transform_indices = @transform_5, window_bounds = array<i64: 16, 128>}]} {
    %c0 = arith.constant 0 : index
    %c0_0 = arith.constant 0 : index
    %0 = vector.load %arg1[%c0, %c0_0] : memref<16x128xf32, #tpu.memory_space<vmem>>, vector<16x128xf32>
    %c0_1 = arith.constant 0 : index
    %c0_2 = arith.constant 0 : index
    %1 = vector.load %arg2[%c0_1, %c0_2] : memref<1x128xf32, #tpu.memory_space<vmem>>, vector<1x128xf32>
    %c0_3 = arith.constant 0 : index
    %c0_4 = arith.constant 0 : index
    %2 = vector.load %arg3[%c0_3, %c0_4] : memref<1x128xf32, #tpu.memory_space<vmem>>, vector<1x128xf32>
    %cst = arith.constant dense<0.000000e+00> : vector<16xf32>
    %3 = vector.multi_reduction <add>, %0, %cst [1] : vector<16x128xf32> to vector<16xf32>
    %4 = vector.shape_cast %3 : vector<16xf32> to vector<16x1xf32>
    %cst_5 = arith.constant 3.125000e-02 : f32
    %5 = vector.broadcast %cst_5 : f32 to vector<16x1xf32>
    %6 = arith.mulf %4, %5 : vector<16x1xf32>
    %7 = vector.broadcast %6 : vector<16x1xf32> to vector<16x128xf32>
    %8 = arith.subf %0, %7 : vector<16x128xf32>
    %9 = tpu.iota {dimensions = array<i32: 1>} : vector<1x128xi32>
    %c32_i32 = arith.constant 32 : i32
    %10 = vector.broadcast %c32_i32 : i32 to vector<1x128xi32>
    %11 = arith.cmpi slt, %9, %10 : vector<1x128xi32>
    %cst_6 = arith.constant 0.000000e+00 : f32
    %12 = vector.shape_cast %11 : vector<1x128xi1> to vector<1x128xi1>
    %13 = vector.broadcast %12 : vector<1x128xi1> to vector<16x128xi1>
    %14 = vector.broadcast %cst_6 : f32 to vector<16x128xf32>
    %15 = arith.select %13, %8, %14 : vector<16x128xi1>, vector<16x128xf32>
    %16 = arith.mulf %15, %15 : vector<16x128xf32>
    %cst_7 = arith.constant dense<0.000000e+00> : vector<16xf32>
    %17 = vector.multi_reduction <add>, %16, %cst_7 [1] : vector<16x128xf32> to vector<16xf32>
    %18 = vector.shape_cast %17 : vector<16xf32> to vector<16x1xf32>
    %cst_8 = arith.constant 3.125000e-02 : f32
    %19 = vector.broadcast %cst_8 : f32 to vector<16x1xf32>
    %20 = arith.mulf %18, %19 : vector<16x1xf32>
    %cst_9 = arith.constant 9.99999974E-6 : f32
    %21 = vector.broadcast %cst_9 : f32 to vector<16x1xf32>
    %22 = arith.addf %20, %21 : vector<16x1xf32>
    %23 = math.rsqrt %22 : vector<16x1xf32>
    %24 = vector.broadcast %23 : vector<16x1xf32> to vector<16x128xf32>
    %25 = arith.mulf %15, %24 : vector<16x128xf32>
    %26 = vector.broadcast %1 : vector<1x128xf32> to vector<16x128xf32>
    %27 = arith.mulf %25, %26 : vector<16x128xf32>
    %28 = vector.broadcast %2 : vector<1x128xf32> to vector<16x128xf32>
    %29 = arith.addf %27, %28 : vector<16x128xf32>
    %c0_10 = arith.constant 0 : index
    %c0_11 = arith.constant 0 : index
    %30 = vector.load %arg4[%c0_10, %c0_11] : memref<128x128xf32, #tpu.memory_space<vmem>>, vector<128x128xf32>
    %cst_12 = arith.constant dense<0.000000e+00> : vector<16x128xf32>
    %31 = tpu.matmul %29, %30, %cst_12 {dimension_numbers = #tpu.dot_dimension_numbers<[1], [0], [0], [1], [0, 0, 1, 1], [], []>} : vector<16x128xf32>, vector<128x128xf32>, vector<16x128xf32> -> vector<16x128xf32>
    %c0_13 = arith.constant 0 : index
    %c0_14 = arith.constant 0 : index
    %32 = vector.load %arg5[%c0_13, %c0_14] : memref<1x128xf32, #tpu.memory_space<vmem>>, vector<1x128xf32>
    %33 = vector.broadcast %32 : vector<1x128xf32> to vector<16x128xf32>
    %34 = arith.addf %31, %33 : vector<16x128xf32>
    %c0_15 = arith.constant 0 : index
    %c0_16 = arith.constant 0 : index
    %35 = vector.load %arg6[%c0_15, %c0_16] : memref<16x128xf32, #tpu.memory_space<vmem>>, vector<16x128xf32>
    tpu.vector_store %arg6[%c0_15, %c0_16], %34 {strides = array<i32>} : memref<16x128xf32, #tpu.memory_space<vmem>>, vector<16x128xf32>,
    return
  }
  func.func @transform_0(%arg0: i32) -> (i32, i32) {
    %c0_i32 = arith.constant 0 : i32
    %c0_i32_0 = arith.constant 0 : i32
    return %arg0, %c0_i32 : i32, i32
  }
  func.func @transform_1(%arg0: i32) -> (i32, i32) {
    %c0_i32 = arith.constant 0 : i32
    %c0_i32_0 = arith.constant 0 : i32
    %c0_i32_1 = arith.constant 0 : i32
    return %c0_i32, %c0_i32_0 : i32, i32
  }
  func.func @transform_2(%arg0: i32) -> (i32, i32) {
    %c0_i32 = arith.constant 0 : i32
    %c0_i32_0 = arith.constant 0 : i32
    %c0_i32_1 = arith.constant 0 : i32
    return %c0_i32, %c0_i32_0 : i32, i32
  }
  func.func @transform_3(%arg0: i32) -> (i32, i32) {
    %c0_i32 = arith.constant 0 : i32
    %c0_i32_0 = arith.constant 0 : i32
    %c0_i32_1 = arith.constant 0 : i32
    return %c0_i32, %c0_i32_0 : i32, i32
  }
  func.func @transform_4(%arg0: i32) -> (i32, i32) {
    %c0_i32 = arith.constant 0 : i32
    %c0_i32_0 = arith.constant 0 : i32
    %c0_i32_1 = arith.constant 0 : i32
    return %c0_i32, %c0_i32_0 : i32, i32
  }
  func.func @transform_5(%arg0: i32) -> (i32, i32) {
    %c0_i32 = arith.constant 0 : i32
    %c0_i32_0 = arith.constant 0 : i32
    return %arg0, %c0_i32 : i32, i32
  }
}

</mosaic_0001>

<llo_original>
// kernel: prenorm_fn.1
$region0: #{prenorm_fn.1}
  #allocation0 [shape = 'u32[]', space=smem, size = 0x4, offset = 0x4, fixed_abs, tag = 'smem constant byte address 0x4 - core index']
  #allocation1 [shape = 'u32[144,128]{1,0:T(1,128)}', space=vmem, size = 0x12000, scoped, tag = 'internal scratch']
  %s0 = inlined_call_operand.vmem [shape: f32[16,128], index: 0, kind: input, shape index: {}]
  %s1 = inlined_call_operand.vmem [shape: f32[1,128], index: 1, kind: input, shape index: {}]
  %s2 = inlined_call_operand.vmem [shape: f32[1,128], index: 2, kind: input, shape index: {}]
  %s3 = inlined_call_operand.vmem [shape: f32[128,128], index: 3, kind: input, shape index: {}]
  %s4 = inlined_call_operand.vmem [shape: f32[1,128], index: 4, kind: input, shape index: {}]
  %s5 = inlined_call_operand.vmem [shape: f32[16,128], index: 5, kind: output, shape index: {}]
  %s6 = sld [smem:[#allocation0]]
  $region30: #{prenorm_fn.1} parent=0
    _
  %s8 = ssub.s32 1, %s6
  %s9 = scalar_select 0, %s8, %s6
  // Predicated region
  $region2: #{prenorm_fn.1} parent=0 // pred_check
    _
  $region3: #{prenorm_fn.1} parent=0 // pred_check_branch
    %11 = sbr.rel (0) target = $region5
  $region4: #{prenorm_fn.1} parent=0 // pred_region
    _
  $region5: #{prenorm_fn.1} parent=0 // pred_fallthru
    _
  // Predicated region
  $region6: #{prenorm_fn.1} parent=0 // pred_check
    _
  $region7: #{prenorm_fn.1} parent=0 // pred_check_branch
    %13 = sbr.rel (0) target = $region9
  $region8: #{prenorm_fn.1} parent=0 // pred_region
    _
  $region9: #{prenorm_fn.1} parent=0 // pred_fallthru
    _
  // Predicated region
  $region10: #{prenorm_fn.1} parent=0 // pred_check
    _
  $region11: #{prenorm_fn.1} parent=0 // pred_check_branch
    %15 = sbr.rel (0) target = $region13
  $region12: #{prenorm_fn.1} parent=0 // pred_region
    _
  $region13: #{prenorm_fn.1} parent=0 // pred_fallthru
    _
  // Predicated region
  $region14: #{prenorm_fn.1} parent=0 // pred_check
    _
  $region15: #{prenorm_fn.1} parent=0 // pred_check_branch
    %17 = sbr.rel (0) target = $region17
  $region16: #{prenorm_fn.1} parent=0 // pred_region
    _
  $region17: #{prenorm_fn.1} parent=0 // pred_fallthru
    _
  // Predicated region
  $region18: #{prenorm_fn.1} parent=0 // pred_check
    _
  $region19: #{prenorm_fn.1} parent=0 // pred_check_branch
    %19 = sbr.rel (0) target = $region21
  $region20: #{prenorm_fn.1} parent=0 // pred_region
    _
  $region21: #{prenorm_fn.1} parent=0 // pred_fallthru
    _
  %v20 = vld [vmem:[%s0] sm:$0xff]
  %v21 = vld [vmem:[%s0 + $0x8] sm:$0xff]
  %v22 = vld [vmem:[%s1] sm:$0x1]
  %v23 = vld [vmem:[%s2] sm:$0x1]
  %24 = vadd.xlane.f32.xlu0 %v20
  %v25 = vpop.xlane.xlu0 %24
  %26 = vadd.xlane.f32.xlu0 %v21
  %v27 = vpop.xlane.xlu0 %26
  %v28 = vmul.f32 %v25, 0.03125
  %v29 = vmul.f32 %v27, 0.03125
  %v30 = vsub.f32 %v20, %v28
  %v31 = vsub.f32 %v21, %v29
  %v32 = vlaneseq
  %v33 = vand.u32 %v32, 127
  %vm34 = vcmp.lt.s32.totalorder %v33, 32
  %v35 = vsel %vm34, 1, 0
  %vm36 = vcmp.eq.s32.totalorder %v35, 1
  %v37 = vsel %vm36, %v30, 0.0
  %v38 = vsel %vm36, %v31, 0.0
  %v39 = vmul.f32 %v37, %v37
  %v40 = vmul.f32 %v38, %v38
  %41 = vadd.xlane.f32.xlu0 %v39
  %v42 = vpop.xlane.xlu0 %41
  %43 = vadd.xlane.f32.xlu0 %v40
  %v44 = vpop.xlane.xlu0 %43
  %v45 = vmul.f32 %v42, 0.03125
  %v46 = vmul.f32 %v44, 0.03125
  %v47 = vadd.f32 %v45, 1e-05
  %v48 = vadd.f32 %v46, 1e-05
  %v49 = vrsqrt.pop %v47
  %v50 = vrsqrt.pop %v48
  %v51 = vmul.f32 %v37, %v49
  %v52 = vmul.f32 %v38, %v50
  %v54 = vlaneseq
  %v55 = vshrl.u32 %v54, 7
  %v56 = vsub.s32 0, %v55
  %v57 = vrot.slane %v22, %v56
  %v59 = vmul.f32 %v51, %v57
  %v60 = vmul.f32 %v52, %v57
  %v62 = vlaneseq
  %v63 = vshrl.u32 %v62, 7
  %v64 = vsub.s32 0, %v63
  %v65 = vrot.slane %v23, %v64
  %v67 = vadd.f32 %v59, %v65
  %v68 = vadd.f32 %v60, %v65
  %v69 = vld [vmem:[%s3] sm:$0xff]
  %v70 = vld [vmem:[%s3 + $0x8] sm:$0xff]
  %v71 = vld [vmem:[%s3 + $0x10] sm:$0xff]
  %v72 = vld [vmem:[%s3 + $0x18] sm:$0xff]
  %v73 = vld [vmem:[%s3 + $0x20] sm:$0xff]
  %v74 = vld [vmem:[%s3 + $0x28] sm:$0xff]
  %v75 = vld [vmem:[%s3 + $0x30] sm:$0xff]
  %v76 = vld [vmem:[%s3 + $0x38] sm:$0xff]
  %v77 = vld [vmem:[%s3 + $0x40] sm:$0xff]
  %v78 = vld [vmem:[%s3 + $0x48] sm:$0xff]
  %v79 = vld [vmem:[%s3 + $0x50] sm:$0xff]
  %v80 = vld [vmem:[%s3 + $0x58] sm:$0xff]
  %v81 = vld [vmem:[%s3 + $0x60] sm:$0xff]
  %v82 = vld [vmem:[%s3 + $0x68] sm:$0xff]
  %v83 = vld [vmem:[%s3 + $0x70] sm:$0xff]
  %v84 = vld [vmem:[%s3 + $0x78] sm:$0xff]
  %v85 = vld [vmem:[%s4] sm:$0x1]
  %v87 = vlaneseq
  %v88 = vshrl.u32 %v87, 7
  %v89 = vsub.s32 0, %v88
  %v90 = vrot.slane %v85, %v89
  %92 = vmatprep.subr.mxu0 0.0
  %93 = vmatpush1.msra.mxu0 %v69
  %94 = vmatprep.subr.mxu0 0.0
  %95 = vmatpush1.msra.mxu0 %v70
  %96 = vmatprep.subr.mxu0 0.0
  %97 = vmatpush1.msra.mxu0 %v71
  %98 = vmatprep.subr.mxu0 0.0
  %99 = vmatpush1.msra.mxu0 %v72
  %100 = vmatprep.subr.mxu0 0.0
  %101 = vmatpush1.msra.mxu0 %v73
  %102 = vmatprep.subr.mxu0 0.0
  %103 = vmatpush1.msra.mxu0 %v74
  %104 = vmatprep.subr.mxu0 0.0
  %105 = vmatpush1.msra.mxu0 %v75
  %106 = vmatprep.subr.mxu0 0.0
  %107 = vmatpush1.msra.mxu0 %v76
  %108 = vmatprep.subr.mxu0 0.0
  %109 = vmatpush1.msra.mxu0 %v77
  %110 = vmatprep.subr.mxu0 0.0
  %111 = vmatpush1.msra.mxu0 %v78
  %112 = vmatprep.subr.mxu0 0.0
  %113 = vmatpush1.msra.mxu0 %v79
  %114 = vmatprep.subr.mxu0 0.0
  %115 = vmatpush1.msra.mxu0 %v80
  %116 = vmatprep.subr.mxu0 0.0
  %117 = vmatpush1.msra.mxu0 %v81
  %118 = vmatprep.subr.mxu0 0.0
  %119 = vmatpush1.msra.mxu0 %v82
  %120 = vmatprep.subr.mxu0 0.0
  %121 = vmatpush1.msra.mxu0 %v83
  %122 = vmatprep.subr.mxu0 0.0
  %123 = vmatpush1.msra.mxu0 %v84
  %124 = vmatprep.subr.mxu0 0.0
  %125 = vmatpush1.msra.mxu0 0.0
  %126 = vmatprep.subr.mxu0 0.0
  %127 = vmatpush1.msra.mxu0 0.0
  %128 = vmatprep.subr.mxu0 0.0
  %129 = vmatpush1.msra.mxu0 0.0
  %130 = vmatprep.subr.mxu0 0.0
  %131 = vmatpush1.msra.mxu0 0.0
  %132 = vmatprep.subr.mxu0 0.0
  %133 = vmatpush1.msra.mxu0 0.0
  %134 = vmatprep.subr.mxu0 0.0
  %135 = vmatpush1.msra.mxu0 0.0
  %136 = vmatprep.subr.mxu0 0.0
  %137 = vmatpush1.msra.mxu0 0.0
  %138 = vmatprep.subr.mxu0 0.0
  %139 = vmatpush1.msra.mxu0 0.0
  %140 = vmatprep.subr.mxu0 0.0
  %141 = vmatpush1.msra.mxu0 0.0
  %142 = vmatprep.subr.mxu0 0.0
  %143 = vmatpush1.msra.mxu0 0.0
  %144 = vmatprep.subr.mxu0 0.0
  %145 = vmatpush1.msra.mxu0 0.0
  %146 = vmatprep.subr.mxu0 0.0
  %147 = vmatpush1.msra.mxu0 0.0
  %148 = vmatprep.subr.mxu0 0.0
  %149 = vmatpush1.msra.mxu0 0.0
  %150 = vmatprep.subr.mxu0 0.0
  %151 = vmatpush1.msra.mxu0 0.0
  %152 = vmatprep.subr.mxu0 0.0
  %153 = vmatpush1.msra.mxu0 0.0
  %154 = vmatprep.subr.mxu0 0.0
  %155 = vmatpush1.msra.mxu0 0.0
  %156 = vmatprep.mubr.f32.mxu0 0.0
  %157 = vmatmul.mubr.f32.gmra.mrb[0].mxu0 %v67
  %v158 = vpop.f32.mrb[0].mxu0
  %v159 = vadd.f32 %v90, %v158
  %v160 = vpop.f32.mrb[0].mxu0
  %161 = vmatprep.mubr.f32.mxu0 0.0
  %162 = vmatmul.mubr.f32.gmra.mrb[0].mxu0 %v68
  %v163 = vpop.f32.mrb[0].mxu0
  %v164 = vadd.f32 %v90, %v163
  %v165 = vpop.f32.mrb[0].mxu0
  %166 = vdwg.mxu0
  %167 = vst [vmem:[%s5] sm:$0xff] %v159
  %168 = vst [vmem:[%s5 + $0x8] sm:$0xff] %v164
  // Predicated region
  $region22: #{prenorm_fn.1} parent=0 // pred_check
    _
  $region23: #{prenorm_fn.1} parent=0 // pred_check_branch
    %170 = sbr.rel (0) target = $region25
  $region24: #{prenorm_fn.1} parent=0 // pred_region
    _
  $region25: #{prenorm_fn.1} parent=0 // pred_fallthru
    _
  // Predicated region
  $region26: #{prenorm_fn.1} parent=0 // pred_check
    _
  $region27: #{prenorm_fn.1} parent=0 // pred_check_branch
    %172 = sbr.rel (0) target = $region29
  $region28: #{prenorm_fn.1} parent=0 // pred_region
    _
  $region29: #{prenorm_fn.1} parent=0 // pred_fallthru
    _

</llo_original>
